<compile_context>
chip_gen: v7x
topology: tpu7x:2x2x1
jax: 0.10.0
libtpu: 0.0.40
codegen_flags: <defaults>
</compile_context>

<pallas_src>
import jax
import jax.numpy as jnp
from jax.experimental import pallas as pl
from jax.experimental.pallas import tpu as pltpu

_LANE = 128   # vreg lane width
_SUB = 8      # vreg sublane count


def _identity_kernel(x_ref, o_ref):
    # Whole forward of Identity: o = x (tile-wise copy through VMEM).
    o_ref[...] = x_ref[...]


def _lane_dense_shape(total: int):
    """Pick a (rows, cols) view with cols a multiple of 128.

    Prefer shapes where rows is also a multiple of 8 so every (8,128) vreg tile
    is fully packed (no wasted sublanes or lanes).
    """
    if total % _LANE != 0:
        return None
    for cols in (4096, 2048, 1024, 512, 256, 128):
        if total % cols == 0 and (total // cols) % _SUB == 0:
            return total // cols, cols
    return total // _LANE, _LANE


def _row_tile(rows: int, cols: int, itemsize: int,
              target_bytes: int = 2 * 1024 * 1024) -> int:
    """~2 MiB row tile: in+out, double-buffered -> <= 8 MiB VMEM on any chip."""
    cap = max(1, target_bytes // (cols * itemsize))
    if rows <= cap:
        return rows                       # single tile covers the full rows dim
    return max(_SUB, (cap // _SUB) * _SUB)  # keep the (8,128) divisibility rule


def identity(x: jax.Array) -> jax.Array:
    """Pallas TPU implementation of nn.Identity (returns x unchanged)."""
    total = x.size
    shape2 = _lane_dense_shape(total)
    if shape2 is None:
        # No lane-dense 2D view; Identity needs no compute anyway.
        return x

    rows, cols = shape2
    x2 = x.reshape(rows, cols)
    itemsize = jnp.dtype(x.dtype).itemsize
    tm = _row_tile(rows, cols, itemsize)

    out = pl.pallas_call(
        _identity_kernel,
        out_shape=jax.ShapeDtypeStruct((rows, cols), x.dtype),
        grid=(pl.cdiv(rows, tm),),
        in_specs=[pl.BlockSpec((tm, cols), lambda i: (i, 0))],
        out_specs=pl.BlockSpec((tm, cols), lambda i: (i, 0)),
        # Output aliases the (intermediate) lane-dense input buffer: no extra
        # HBM allocation, and XLA is free to elide the round trip.
        input_output_aliases={0: 0},
        compiler_params=pltpu.CompilerParams(
            dimension_semantics=("parallel",)),
    )(x2)
    return out.reshape(x.shape)


if __name__ == "__main__":
    key = jax.random.PRNGKey(0)
    # Small NCHW input consistent with a conv-style model: batch=2, C=4, H=W=16.
    x = jax.random.normal(key, (2, 4, 16, 16), dtype=jnp.float32)

    # jit so the aliased input is an intermediate inside the computation
    # (clean aliasing, no donation warnings in eager mode).
    y = jax.jit(identity)(x)
    jax.block_until_ready(y)

    assert y.shape == x.shape and y.dtype == x.dtype
    assert bool(jnp.all(y == x))
    print("KERNEL_OK")
</pallas_src>

<mosaic_0001>
module attributes {stable_mosaic.version = 11 : i64} {
  func.func @_identity_kernel(%arg0: i32, %arg1: memref<8x256xf32, #tpu.memory_space<vmem>>, %arg2: memref<8x256xf32, #tpu.memory_space<vmem>>) attributes {dimension_semantics = [#tpu.dimension_semantics<parallel>], iteration_bounds = array<i64: 1>, scalar_prefetch = 0 : i64, scratch_operands = 0 : i64, tpu.core_type = #tpu.core_type<tc>, window_params = [{transform_indices = @transform_0, window_bounds = array<i64: 8, 256>}, {transform_indices = @transform_1, window_bounds = array<i64: 8, 256>}]} {
    %c0 = arith.constant 0 : index
    %c0_0 = arith.constant 0 : index
    %0 = vector.load %arg1[%c0, %c0_0] : memref<8x256xf32, #tpu.memory_space<vmem>>, vector<8x256xf32>
    %c0_1 = arith.constant 0 : index
    %c0_2 = arith.constant 0 : index
    %1 = vector.load %arg2[%c0_1, %c0_2] : memref<8x256xf32, #tpu.memory_space<vmem>>, vector<8x256xf32>
    tpu.vector_store %arg2[%c0_1, %c0_2], %0 {strides = array<i32>} : memref<8x256xf32, #tpu.memory_space<vmem>>, vector<8x256xf32>,
    return
  }
  func.func @transform_0(%arg0: i32) -> (i32, i32) {
    %c0_i32 = arith.constant 0 : i32
    %c0_i32_0 = arith.constant 0 : i32
    return %arg0, %c0_i32 : i32, i32
  }
  func.func @transform_1(%arg0: i32) -> (i32, i32) {
    %c0_i32 = arith.constant 0 : i32
    %c0_i32_0 = arith.constant 0 : i32
    return %arg0, %c0_i32 : i32, i32
  }
}

</mosaic_0001>

<llo_original>
// kernel: identity.1
$region0: #{identity.1}
  #allocation0 [shape = 'u32[]', space=smem, size = 0x4, offset = 0x4, fixed_abs, tag = 'smem constant byte address 0x4 - core index']
  #allocation1 [shape = 'u32[144,128]{1,0:T(1,128)}', space=vmem, size = 0x12000, scoped, tag = 'internal scratch']
  %s0 = inlined_call_operand.vmem [shape: f32[8,256], index: 0, kind: input, shape index: {}, may-alias: {0,1}]
  %s1 = inlined_call_operand.vmem [shape: f32[8,256], index: 1, kind: output, shape index: {}, may-alias: {0,1}]
  %s2 = sld [smem:[#allocation0]]
  $region14: #{identity.1} parent=0
    _
  %s4 = ssub.s32 1, %s2
  %s5 = scalar_select 0, %s4, %s2
  // Predicated region
  $region2: #{identity.1} parent=0 // pred_check
    _
  $region3: #{identity.1} parent=0 // pred_check_branch
    %7 = sbr.rel (0) target = $region5
  $region4: #{identity.1} parent=0 // pred_region
    _
  $region5: #{identity.1} parent=0 // pred_fallthru
    _
  %v8 = vld [vmem:[%s0] sm:$0xff]
  %v9 = vld [vmem:[%s0 + $0x8] sm:$0xff]
  %10 = vst [vmem:[%s1] sm:$0xff] %v8
  %11 = vst [vmem:[%s1 + $0x8] sm:$0xff] %v9
  // Predicated region
  $region6: #{identity.1} parent=0 // pred_check
    _
  $region7: #{identity.1} parent=0 // pred_check_branch
    %13 = sbr.rel (0) target = $region9
  $region8: #{identity.1} parent=0 // pred_region
    _
  $region9: #{identity.1} parent=0 // pred_fallthru
    _
  // Predicated region
  $region10: #{identity.1} parent=0 // pred_check
    _
  $region11: #{identity.1} parent=0 // pred_check_branch
    %15 = sbr.rel (0) target = $region13
  $region12: #{identity.1} parent=0 // pred_region
    _
  $region13: #{identity.1} parent=0 // pred_fallthru
    _

</llo_original>
